<compile_context>
chip_gen: v7x
topology: tpu7x:2x2x1
jax: 0.10.0
libtpu: 0.0.40
codegen_flags: <defaults>
</compile_context>

<pallas_src>
import jax
import jax.numpy as jnp
from jax.experimental import pallas as pl
from jax.experimental.pallas import tpu as pltpu

_BN_EPS = 1e-5


# ---------------------------------------------------------------------------
# Fused kernel: whole batch in one invocation, everything stays on-chip.
# ---------------------------------------------------------------------------
def _attention_gate_kernel(g_ref, x_ref, w_ref, pk_ref, o_ref, gx_scr):
    # g_ref : (N, F_g, HW)      f32   gating signal (channels on sublanes, pixels on lanes)
    # x_ref : (N, F_l, HW)      f32   input feature map
    # w_ref : (F_l, F_g+F_l)    bf16  [W_g | W_x] 1x1 conv weights, BN scale folded
    # pk_ref: (F_l, 3)          f32   col0 = bg+bx (folded), col1 = psi weight, col2 = psi bias
    # o_ref : (N, F_l, HW)      f32   x * psi
    # gx_scr: (F_g+F_l, N*HW)   f32   VMEM scratch: stacked [g; x] for all batch elements
    N, F_g, HW = g_ref.shape
    F_l = x_ref.shape[1]

    # Stack every batch element along the lane axis so the fused conv is ONE MXU push.
    # (Static slices -> plain masked sublane/lane stores, no relayout.)
    for n in range(N):
        gx_scr[0:F_g, n * HW:(n + 1) * HW] = g_ref[n]
        gx_scr[F_g:F_g + F_l, n * HW:(n + 1) * HW] = x_ref[n]

    b = pk_ref[:, 0:1]        # (F_l, 1)  combined folded bias (bg + bx)
    wp = pk_ref[:, 1:2]       # (F_l, 1)  psi conv weight as a column
    bp = pk_ref[0:1, 2:3]     # (1, 1)    psi folded bias

    # a = relu(BN(Conv_g(g)) + BN(Conv_x(x))) for the whole batch: single bf16 MXU matmul.
    a = jnp.dot(w_ref[...], gx_scr[...].astype(jnp.bfloat16),
                preferred_element_type=jnp.float32) + b          # (F_l, N*HW)
    a = jnp.maximum(a, 0.0)

    # psi = sigmoid(BN(Conv_psi(a))) -> single output channel: per-channel weighted sum
    # (XLU reduce) + exp / approx reciprocal (EUP) -- both off the VALU critical path.
    p = jnp.sum(a * wp, axis=0, keepdims=True) + bp              # (1, N*HW)
    p = pl.reciprocal(1.0 + jnp.exp(-p), approx=True)            # sigmoid

    # Gate: x * psi (psi broadcasts over channels). Lane-dense (HW multiple of 128) stores.
    for n in range(N):
        o_ref[n] = x_ref[n] * p[:, n * HW:(n + 1) * HW]


# ---------------------------------------------------------------------------
# pallas_call wrapper
# ---------------------------------------------------------------------------
@jax.jit
def attention_gate_forward(g_nchw, x_nchw, params):
    N, F_g, H, W = g_nchw.shape
    _, F_l, _, _ = x_nchw.shape
    HW = H * W

    # 1x1 convs -> contiguous (N, C, HW) views (free reshape, no transpose, no cast).
    g_flat = g_nchw.reshape(N, F_g, HW)
    x_flat = x_nchw.reshape(N, F_l, HW)

    cost = pl.CostEstimate(
        flops=2 * N * F_l * (F_g + F_l) * HW + 5 * N * F_l * HW,
        transcendentals=N * HW,
        bytes_accessed=(g_flat.size + 2 * x_flat.size + N * F_l * HW) * 4
        + params["w_cat"].size * 2 + params["pack"].size * 4,
    )

    out = pl.pallas_call(
        _attention_gate_kernel,
        out_shape=jax.ShapeDtypeStruct((N, F_l, HW), jnp.float32),
        grid=(1,),  # batch collapsed into a single invocation (latency-bound problem)
        in_specs=[
            pl.BlockSpec((N, F_g, HW), lambda i: (0, 0, 0)),
            pl.BlockSpec((N, F_l, HW), lambda i: (0, 0, 0)),
            pl.BlockSpec((F_l, F_g + F_l), lambda i: (0, 0)),
            pl.BlockSpec((F_l, 3), lambda i: (0, 0)),
        ],
        out_specs=pl.BlockSpec((N, F_l, HW), lambda i: (0, 0, 0)),
        scratch_shapes=[pltpu.VMEM((F_g + F_l, N * HW), jnp.float32)],
        cost_estimate=cost,
        compiler_params=pltpu.CompilerParams(
            dimension_semantics=("arbitrary",)),
    )(g_flat, x_flat, params["w_cat"], params["pack"])

    return out.reshape(N, F_l, H, W)


# ---------------------------------------------------------------------------
# Synthetic parameters (deterministic) + BN folding into the 1x1 convs.
# ---------------------------------------------------------------------------
def _fold_conv_bn(w_oi, conv_bias, gamma, beta, mean, var, eps=_BN_EPS):
    # w_oi: (Cout, Cin) 1x1 conv weight; BN in inference mode (running stats).
    scale = gamma / jnp.sqrt(var + eps)                       # (Cout,)
    w_fold = (w_oi * scale[:, None]).astype(jnp.float32)
    b_fold = ((conv_bias - mean) * scale + beta).astype(jnp.float32)
    return w_fold, b_fold


def init_attention_gate_params(key, F_g, F_l):
    ks = jax.random.split(key, 9)

    def bn_stats(k, c):
        k1, k2, k3, k4 = jax.random.split(k, 4)
        gamma = 1.0 + 0.1 * jax.random.normal(k1, (c,), jnp.float32)
        beta = 0.1 * jax.random.normal(k2, (c,), jnp.float32)
        mean = 0.05 * jax.random.normal(k3, (c,), jnp.float32)
        var = 1.0 + 0.1 * jnp.abs(jax.random.normal(k4, (c,), jnp.float32))
        return gamma, beta, mean, var

    # W_g: Conv2d(F_g -> F_l, 1x1, bias=True) + BN(F_l)
    wg_raw = 0.1 * jax.random.normal(ks[0], (F_l, F_g), jnp.float32)
    bg_raw = 0.01 * jax.random.normal(ks[1], (F_l,), jnp.float32)
    wg, bg = _fold_conv_bn(wg_raw, bg_raw, *bn_stats(ks[2], F_l))

    # W_x: Conv2d(F_l -> F_l, 1x1, bias=True) + BN(F_l)
    wx_raw = 0.1 * jax.random.normal(ks[3], (F_l, F_l), jnp.float32)
    bx_raw = 0.01 * jax.random.normal(ks[4], (F_l,), jnp.float32)
    wx, bx = _fold_conv_bn(wx_raw, bx_raw, *bn_stats(ks[5], F_l))

    # psi: Conv2d(F_l -> 1, 1x1, bias=True) + BN(1) + Sigmoid
    wp_raw = 0.1 * jax.random.normal(ks[6], (1, F_l), jnp.float32)
    bp_raw = 0.01 * jax.random.normal(ks[7], (1,), jnp.float32)
    wp, bp = _fold_conv_bn(wp_raw, bp_raw, *bn_stats(ks[8], 1))

    # Fused MXU weight [W_g | W_x] in bf16 (f32 accumulate in-kernel).
    w_cat = jnp.concatenate([wg, wx], axis=1).astype(jnp.bfloat16)   # (F_l, F_g+F_l)

    # All small params packed into one (F_l, 3) f32 block -> single DMA.
    pack = jnp.zeros((F_l, 3), jnp.float32)
    pack = pack.at[:, 0].set(bg + bx)     # combined folded bias
    pack = pack.at[:, 1].set(wp[0])       # psi weight column
    pack = pack.at[:, 2].set(bp[0])       # psi bias (kernel reads row 0)

    return dict(w_cat=w_cat, pack=pack)


# ---------------------------------------------------------------------------
# Pure-JAX reference (same folded params) for a correctness check.
# ---------------------------------------------------------------------------
def attention_gate_reference(g, x, params):
    F_g = g.shape[1]
    w = params["w_cat"].astype(jnp.float32)          # (F_l, F_g+F_l)
    wg, wx = w[:, :F_g], w[:, F_g:]
    b = params["pack"][:, 0].reshape(1, -1, 1, 1)
    wp = params["pack"][:, 1]                        # (F_l,)
    bp = params["pack"][0, 2]

    g1 = jnp.einsum("oc,nchw->nohw", wg, g)
    x1 = jnp.einsum("oc,nchw->nohw", wx, x)
    a = jnp.maximum(g1 + x1 + b, 0.0)
    p = jnp.einsum("c,nchw->nhw", wp, a)[:, None, :, :] + bp
    p = jax.nn.sigmoid(p)
    return x * p


if __name__ == "__main__":
    key = jax.random.PRNGKey(0)
    k_g, k_x, k_p = jax.random.split(key, 3)

    batch, F_g, F_l, H, W = 2, 8, 4, 16, 16

    g = jax.random.normal(k_g, (batch, F_g, H, W), jnp.float32)
    x = jax.random.normal(k_x, (batch, F_l, H, W), jnp.float32)
    params = init_attention_gate_params(k_p, F_g, F_l)

    y = attention_gate_forward(g, x, params)
    jax.block_until_ready(y)

    assert y.shape == (batch, F_l, H, W), y.shape
    y_ref = attention_gate_reference(g, x, params)
    err = float(jnp.max(jnp.abs(y - y_ref)))
    assert jnp.allclose(y, y_ref, atol=3e-2, rtol=3e-2), err
    print("KERNEL_OK")
</pallas_src>

<mosaic_0001>
module attributes {stable_mosaic.version = 11 : i64} {
  func.func @_attention_gate_kernel(%arg0: i32, %arg1: memref<2x8x256xf32, #tpu.memory_space<vmem>>, %arg2: memref<2x4x256xf32, #tpu.memory_space<vmem>>, %arg3: memref<4x12xbf16, #tpu.memory_space<vmem>>, %arg4: memref<4x3xf32, #tpu.memory_space<vmem>>, %arg5: memref<2x4x256xf32, #tpu.memory_space<vmem>>, %arg6: memref<12x512xf32, #tpu.memory_space<vmem>>) attributes {dimension_semantics = [#tpu.dimension_semantics<arbitrary>], iteration_bounds = array<i64: 1>, scalar_prefetch = 0 : i64, scratch_operands = 1 : i64, tpu.core_type = #tpu.core_type<tc>, window_params = [{pipeline_mode = #tpu.pipeline_mode<synchronous>, transform_indices = @transform_0, window_bounds = array<i64: 2, 8, 256>}, {pipeline_mode = #tpu.pipeline_mode<synchronous>, transform_indices = @transform_1, window_bounds = array<i64: 2, 4, 256>}, {pipeline_mode = #tpu.pipeline_mode<synchronous>, transform_indices = @transform_2, window_bounds = array<i64: 4, 12>}, {pipeline_mode = #tpu.pipeline_mode<synchronous>, transform_indices = @transform_3, window_bounds = array<i64: 4, 3>}, {pipeline_mode = #tpu.pipeline_mode<synchronous>, transform_indices = @transform_4, window_bounds = array<i64: 2, 4, 256>}]} {
    %c0 = arith.constant 0 : index
    %c0_0 = arith.constant 0 : index
    %c0_1 = arith.constant 0 : index
    %0 = vector.load %arg1[%c0, %c0_0, %c0_1] : memref<2x8x256xf32, #tpu.memory_space<vmem>>, vector<1x8x256xf32>
    %1 = vector.shape_cast %0 : vector<1x8x256xf32> to vector<8x256xf32>
    %c0_2 = arith.constant 0 : index
    %c0_3 = arith.constant 0 : index
    %2 = vector.load %arg6[%c0_2, %c0_3] : memref<12x512xf32, #tpu.memory_space<vmem>>, vector<8x256xf32>
    tpu.vector_store %arg6[%c0_2, %c0_3], %1 {strides = array<i32>} : memref<12x512xf32, #tpu.memory_space<vmem>>, vector<8x256xf32>,
    %c0_4 = arith.constant 0 : index
    %c0_5 = arith.constant 0 : index
    %c0_6 = arith.constant 0 : index
    %3 = vector.load %arg2[%c0_4, %c0_5, %c0_6] : memref<2x4x256xf32, #tpu.memory_space<vmem>>, vector<1x4x256xf32>
    %4 = vector.shape_cast %3 : vector<1x4x256xf32> to vector<4x256xf32>
    %c8 = arith.constant 8 : index
    %c0_7 = arith.constant 0 : index
    %5 = vector.load %arg6[%c8, %c0_7] : memref<12x512xf32, #tpu.memory_space<vmem>>, vector<4x256xf32>
    tpu.vector_store %arg6[%c8, %c0_7], %4 {strides = array<i32>} : memref<12x512xf32, #tpu.memory_space<vmem>>, vector<4x256xf32>,
    %c1 = arith.constant 1 : index
    %c0_8 = arith.constant 0 : index
    %c0_9 = arith.constant 0 : index
    %6 = vector.load %arg1[%c1, %c0_8, %c0_9] : memref<2x8x256xf32, #tpu.memory_space<vmem>>, vector<1x8x256xf32>
    %7 = vector.shape_cast %6 : vector<1x8x256xf32> to vector<8x256xf32>
    %c0_10 = arith.constant 0 : index
    %c256 = arith.constant 256 : index
    %8 = vector.load %arg6[%c0_10, %c256] : memref<12x512xf32, #tpu.memory_space<vmem>>, vector<8x256xf32>
    tpu.vector_store %arg6[%c0_10, %c256], %7 {strides = array<i32>} : memref<12x512xf32, #tpu.memory_space<vmem>>, vector<8x256xf32>,
    %c1_11 = arith.constant 1 : index
    %c0_12 = arith.constant 0 : index
    %c0_13 = arith.constant 0 : index
    %9 = vector.load %arg2[%c1_11, %c0_12, %c0_13] : memref<2x4x256xf32, #tpu.memory_space<vmem>>, vector<1x4x256xf32>
    %10 = vector.shape_cast %9 : vector<1x4x256xf32> to vector<4x256xf32>
    %c8_14 = arith.constant 8 : index
    %c256_15 = arith.constant 256 : index
    %11 = vector.load %arg6[%c8_14, %c256_15] : memref<12x512xf32, #tpu.memory_space<vmem>>, vector<4x256xf32>
    tpu.vector_store %arg6[%c8_14, %c256_15], %10 {strides = array<i32>} : memref<12x512xf32, #tpu.memory_space<vmem>>, vector<4x256xf32>,
    %c0_16 = arith.constant 0 : index
    %c0_17 = arith.constant 0 : index
    %12 = vector.load %arg4[%c0_16, %c0_17] : memref<4x3xf32, #tpu.memory_space<vmem>>, vector<4x1xf32>
    %c0_18 = arith.constant 0 : index
    %c1_19 = arith.constant 1 : index
    %13 = vector.load %arg4[%c0_18, %c1_19] : memref<4x3xf32, #tpu.memory_space<vmem>>, vector<4x1xf32>
    %c0_20 = arith.constant 0 : index
    %c2 = arith.constant 2 : index
    %14 = vector.load %arg4[%c0_20, %c2] : memref<4x3xf32, #tpu.memory_space<vmem>>, vector<1x1xf32>
    %c0_21 = arith.constant 0 : index
    %c0_22 = arith.constant 0 : index
    %15 = vector.load %arg3[%c0_21, %c0_22] : memref<4x12xbf16, #tpu.memory_space<vmem>>, vector<4x12xbf16>
    %c0_23 = arith.constant 0 : index
    %c0_24 = arith.constant 0 : index
    %16 = vector.load %arg6[%c0_23, %c0_24] : memref<12x512xf32, #tpu.memory_space<vmem>>, vector<12x512xf32>
    %17 = arith.truncf %16 : vector<12x512xf32> to vector<12x512xbf16>
    %cst = arith.constant dense<0.000000e+00> : vector<4x512xf32>
    %18 = tpu.matmul %15, %17, %cst {dimension_numbers = #tpu.dot_dimension_numbers<[1], [0], [0], [1], [0, 0, 1, 1], [], []>} : vector<4x12xbf16>, vector<12x512xbf16>, vector<4x512xf32> -> vector<4x512xf32>
    %19 = vector.broadcast %12 : vector<4x1xf32> to vector<4x512xf32>
    %20 = arith.addf %18, %19 : vector<4x512xf32>
    %cst_25 = arith.constant 0.000000e+00 : f32
    %21 = vector.broadcast %cst_25 : f32 to vector<4x512xf32>
    %22 = arith.maximumf %20, %21 : vector<4x512xf32>
    %23 = vector.broadcast %13 : vector<4x1xf32> to vector<4x512xf32>
    %24 = arith.mulf %22, %23 : vector<4x512xf32>
    %cst_26 = arith.constant dense<0.000000e+00> : vector<512xf32>
    %25 = vector.multi_reduction <add>, %24, %cst_26 [0] : vector<4x512xf32> to vector<512xf32>
    %26 = vector.shape_cast %25 : vector<512xf32> to vector<1x512xf32>
    %27 = vector.broadcast %14 : vector<1x1xf32> to vector<1x512xf32>
    %28 = arith.addf %26, %27 : vector<1x512xf32>
    %cst_27 = arith.constant 0.000000e+00 : f32
    %29 = vector.broadcast %cst_27 : f32 to vector<1x512xf32>
    %30 = arith.subf %29, %28 : vector<1x512xf32>
    %31 = math.exp %30 : vector<1x512xf32>
    %cst_28 = arith.constant 1.000000e+00 : f32
    %32 = vector.broadcast %cst_28 : f32 to vector<1x512xf32>
    %33 = arith.addf %32, %31 : vector<1x512xf32>
    %34 = tpu.reciprocal %33 {approx = true} : vector<1x512xf32> -> vector<1x512xf32>
    %c0_29 = arith.constant 0 : index
    %c0_30 = arith.constant 0 : index
    %c0_31 = arith.constant 0 : index
    %35 = vector.load %arg2[%c0_29, %c0_30, %c0_31] : memref<2x4x256xf32, #tpu.memory_space<vmem>>, vector<1x4x256xf32>
    %36 = vector.shape_cast %35 : vector<1x4x256xf32> to vector<4x256xf32>
    %37 = vector.extract_strided_slice %34 {offsets = [0, 0], sizes = [1, 256], strides = [1, 1]} : vector<1x512xf32> to vector<1x256xf32>
    %38 = vector.broadcast %37 : vector<1x256xf32> to vector<4x256xf32>
    %39 = arith.mulf %36, %38 : vector<4x256xf32>
    %c0_32 = arith.constant 0 : index
    %c0_33 = arith.constant 0 : index
    %c0_34 = arith.constant 0 : index
    %40 = vector.load %arg5[%c0_32, %c0_33, %c0_34] : memref<2x4x256xf32, #tpu.memory_space<vmem>>, vector<1x4x256xf32>
    %41 = vector.shape_cast %40 : vector<1x4x256xf32> to vector<4x256xf32>
    %42 = vector.shape_cast %39 : vector<4x256xf32> to vector<1x4x256xf32>
    tpu.vector_store %arg5[%c0_32, %c0_33, %c0_34], %42 {strides = array<i32>} : memref<2x4x256xf32, #tpu.memory_space<vmem>>, vector<1x4x256xf32>,
    %c1_35 = arith.constant 1 : index
    %c0_36 = arith.constant 0 : index
    %c0_37 = arith.constant 0 : index
    %43 = vector.load %arg2[%c1_35, %c0_36, %c0_37] : memref<2x4x256xf32, #tpu.memory_space<vmem>>, vector<1x4x256xf32>
    %44 = vector.shape_cast %43 : vector<1x4x256xf32> to vector<4x256xf32>
    %45 = vector.extract_strided_slice %34 {offsets = [0, 256], sizes = [1, 256], strides = [1, 1]} : vector<1x512xf32> to vector<1x256xf32>
    %46 = vector.broadcast %45 : vector<1x256xf32> to vector<4x256xf32>
    %47 = arith.mulf %44, %46 : vector<4x256xf32>
    %c1_38 = arith.constant 1 : index
    %c0_39 = arith.constant 0 : index
    %c0_40 = arith.constant 0 : index
    %48 = vector.load %arg5[%c1_38, %c0_39, %c0_40] : memref<2x4x256xf32, #tpu.memory_space<vmem>>, vector<1x4x256xf32>
    %49 = vector.shape_cast %48 : vector<1x4x256xf32> to vector<4x256xf32>
    %50 = vector.shape_cast %47 : vector<4x256xf32> to vector<1x4x256xf32>
    tpu.vector_store %arg5[%c1_38, %c0_39, %c0_40], %50 {strides = array<i32>} : memref<2x4x256xf32, #tpu.memory_space<vmem>>, vector<1x4x256xf32>,
    return
  }
  func.func @transform_0(%arg0: i32) -> (i32, i32, i32) {
    %c0_i32 = arith.constant 0 : i32
    %c0_i32_0 = arith.constant 0 : i32
    %c0_i32_1 = arith.constant 0 : i32
    %c0_i32_2 = arith.constant 0 : i32
    return %c0_i32, %c0_i32_0, %c0_i32_1 : i32, i32, i32
  }
  func.func @transform_1(%arg0: i32) -> (i32, i32, i32) {
    %c0_i32 = arith.constant 0 : i32
    %c0_i32_0 = arith.constant 0 : i32
    %c0_i32_1 = arith.constant 0 : i32
    %c0_i32_2 = arith.constant 0 : i32
    return %c0_i32, %c0_i32_0, %c0_i32_1 : i32, i32, i32
  }
  func.func @transform_2(%arg0: i32) -> (i32, i32) {
    %c0_i32 = arith.constant 0 : i32
    %c0_i32_0 = arith.constant 0 : i32
    %c0_i32_1 = arith.constant 0 : i32
    return %c0_i32, %c0_i32_0 : i32, i32
  }
  func.func @transform_3(%arg0: i32) -> (i32, i32) {
    %c0_i32 = arith.constant 0 : i32
    %c0_i32_0 = arith.constant 0 : i32
    %c0_i32_1 = arith.constant 0 : i32
    return %c0_i32, %c0_i32_0 : i32, i32
  }
  func.func @transform_4(%arg0: i32) -> (i32, i32, i32) {
    %c0_i32 = arith.constant 0 : i32
    %c0_i32_0 = arith.constant 0 : i32
    %c0_i32_1 = arith.constant 0 : i32
    %c0_i32_2 = arith.constant 0 : i32
    return %c0_i32, %c0_i32_0, %c0_i32_1 : i32, i32, i32
  }
}

</mosaic_0001>

<llo_original>
// kernel: attention_gate_forward.1
$region0: #{attention_gate_forward.1}
  #allocation0 [shape = 'u32[]', space=smem, size = 0x4, offset = 0x4, fixed_abs, tag = 'smem constant byte address 0x4 - core index']
  #allocation1 [shape = 'u32[144,128]{1,0:T(1,128)}', space=vmem, size = 0x12000, scoped, tag = 'internal scratch']
  #allocation2 [shape = 'f32[12,512]{1,0:T(8,128)}', space=vmem, size = 0x8000, scoped, tag = 'scratch operand']
  %s0 = inlined_call_operand.vmem [shape: f32[2,8,256], index: 0, kind: input, shape index: {}]
  %s1 = inlined_call_operand.vmem [shape: f32[2,4,256], index: 1, kind: input, shape index: {}]
  %s2 = inlined_call_operand.vmem [shape: bf16[4,12], index: 2, kind: input, shape index: {}]
  %s3 = inlined_call_operand.vmem [shape: f32[4,3], index: 3, kind: input, shape index: {}]
  %s4 = inlined_call_operand.vmem [shape: f32[2,4,256], index: 4, kind: output, shape index: {}]
  %s5 = sld [smem:[#allocation0]]
  $region26: #{attention_gate_forward.1} parent=0
    _
  %s7 = ssub.s32 1, %s5
  %s8 = scalar_select 0, %s7, %s5
  // Predicated region
  $region2: #{attention_gate_forward.1} parent=0 // pred_check
    _
  $region3: #{attention_gate_forward.1} parent=0 // pred_check_branch
    %10 = sbr.rel (0) target = $region5
  $region4: #{attention_gate_forward.1} parent=0 // pred_region
    _
  $region5: #{attention_gate_forward.1} parent=0 // pred_fallthru
    _
  // Predicated region
  $region6: #{attention_gate_forward.1} parent=0 // pred_check
    _
  $region7: #{attention_gate_forward.1} parent=0 // pred_check_branch
    %12 = sbr.rel (0) target = $region9
  $region8: #{attention_gate_forward.1} parent=0 // pred_region
    _
  $region9: #{attention_gate_forward.1} parent=0 // pred_fallthru
    _
  // Predicated region
  $region10: #{attention_gate_forward.1} parent=0 // pred_check
    _
  $region11: #{attention_gate_forward.1} parent=0 // pred_check_branch
    %14 = sbr.rel (0) target = $region13
  $region12: #{attention_gate_forward.1} parent=0 // pred_region
    _
  $region13: #{attention_gate_forward.1} parent=0 // pred_fallthru
    _
  // Predicated region
  $region14: #{attention_gate_forward.1} parent=0 // pred_check
    _
  $region15: #{attention_gate_forward.1} parent=0 // pred_check_branch
    %16 = sbr.rel (0) target = $region17
  $region16: #{attention_gate_forward.1} parent=0 // pred_region
    _
  $region17: #{attention_gate_forward.1} parent=0 // pred_fallthru
    _
  %v18 = vld [vmem:[%s0] sm:$0xff]
  %v19 = vld [vmem:[%s0 + $0x8] sm:$0xff]
  %20 = vst [vmem:[#allocation2] sm:$0xff] %v18
  %21 = vst [vmem:[#allocation2 + $0x8] sm:$0xff] %v19
  %v22 = vld [vmem:[%s1] sm:$0xff]
  %v24 = vcombine.high %v22, %v22
  %26 = vst [vmem:[#allocation2 + $0x20] sm:$0xf] %v22
  %27 = vst [vmem:[#allocation2 + $0x28] sm:$0xf] %v24
  %s28 = scalar_lea.vmem %s0, 16
  %v29 = vld [vmem:[%s28] sm:$0xff]
  %v30 = vld [vmem:[%s28 + $0x8] sm:$0xff]
  %31 = vst [vmem:[#allocation2 + $0x10] sm:$0xff] %v29
  %32 = vst [vmem:[#allocation2 + $0x18] sm:$0xff] %v30
  %s33 = scalar_lea.vmem %s1, 8
  %v34 = vld [vmem:[%s33] sm:$0xff]
  %v36 = vcombine.high %v34, %v34
  %38 = vst [vmem:[#allocation2 + $0x30] sm:$0xf] %v34
  %39 = vst [vmem:[#allocation2 + $0x38] sm:$0xf] %v36
  %v40 = vld [vmem:[%s3] sm:$0xf]
  %v41 = vld [vmem:[%s3] sm:$0x1]
  %v42 = vld [vmem:[%s2] sm:$0x3]
  %v43 = vld [vmem:[#allocation2] sm:$0xff]
  %v44 = vld [vmem:[#allocation2 + $0x8] sm:$0xff]
  %v45 = vld [vmem:[#allocation2 + $0x10] sm:$0xff]
  %v46 = vld [vmem:[#allocation2 + $0x18] sm:$0xff]
  %v47 = vld [vmem:[#allocation2 + $0x20] sm:$0xf]
  %v48 = vld [vmem:[#allocation2 + $0x28] sm:$0xf]
  %v49 = vld [vmem:[#allocation2 + $0x30] sm:$0xf]
  %v50 = vld [vmem:[#allocation2 + $0x38] sm:$0xf]
  %v51 = vpack.c.bf16 %v47, %v43
  %v52 = vpack.c.bf16 %v48, %v44
  %v53 = vpack.c.bf16 %v49, %v45
  %v54 = vpack.c.bf16 %v50, %v46
  %56 = vset.pattern.permute.xlu0 0
  %57 = vperm.xlu0 %56, %v40
  %v58 = vpop.permute.xlu0 %57
  %vm60 = vcmask 97280
  %v62 = vsel %vm60, %v42, 0
  %vm64 = vcmask 1045504
  %v66 = vsel %vm64, %v51, 0
  %v69 = vsel %vm64, %v52, 0
  %v72 = vsel %vm64, %v53, 0
  %v75 = vsel %vm64, %v54, 0
  %77 = vmatprep.subr.bf16.mxu0 %v69
  %78 = vmatpush1.bf16.msra.mxu0 %v66
  %79 = vmatprep.subr.bf16.mxu0 0
  %80 = vmatpush1.bf16.msra.mxu0 0
  %81 = vmatprep.subr.bf16.mxu0 0
  %82 = vmatpush1.bf16.msra.mxu0 0
  %83 = vmatprep.subr.bf16.mxu0 0
  %84 = vmatpush1.bf16.msra.mxu0 0
  %85 = vmatprep.subr.bf16.mxu0 0
  %86 = vmatpush1.bf16.msra.mxu0 0
  %87 = vmatprep.subr.bf16.mxu0 0
  %88 = vmatpush1.bf16.msra.mxu0 0
  %89 = vmatprep.subr.bf16.mxu0 0
  %90 = vmatpush1.bf16.msra.mxu0 0
  %91 = vmatprep.subr.bf16.mxu0 0
  %92 = vmatpush1.bf16.msra.mxu0 0
  %93 = vmatprep.subr.bf16.mxu0 0
  %94 = vmatpush1.bf16.msra.mxu0 0
  %95 = vmatprep.subr.bf16.mxu0 0
  %96 = vmatpush1.bf16.msra.mxu0 0
  %97 = vmatprep.subr.bf16.mxu0 0
  %98 = vmatpush1.bf16.msra.mxu0 0
  %99 = vmatprep.subr.bf16.mxu0 0
  %100 = vmatpush1.bf16.msra.mxu0 0
  %101 = vmatprep.subr.bf16.mxu0 0
  %102 = vmatpush1.bf16.msra.mxu0 0
  %103 = vmatprep.subr.bf16.mxu0 0
  %104 = vmatpush1.bf16.msra.mxu0 0
  %105 = vmatprep.subr.bf16.mxu0 0
  %106 = vmatpush1.bf16.msra.mxu0 0
  %107 = vmatprep.subr.bf16.mxu0 0
  %108 = vmatpush1.bf16.msra.mxu0 0
  %109 = vmatprep.mubr.bf16.mxu0 0
  %110 = vmatmul.mubr.bf16.gmra.mrb[0].mxu0 %v62
  %v111 = vpop.f32.mrb[0].mxu0
  %v112 = vadd.f32 %v58, %v111
  %v113 = vpop.f32.mrb[0].mxu0
  %v114 = vadd.f32 %v58, %v113
  %v115 = vpop.f32.mrb[0].mxu0
  %v116 = vpop.f32.mrb[0].mxu0
  %117 = vdwg.mxu0
  %118 = vmatprep.subr.bf16.mxu0 %v75
  %119 = vmatpush1.bf16.msra.mxu0 %v72
  %120 = vmatprep.subr.bf16.mxu0 0
  %121 = vmatpush1.bf16.msra.mxu0 0
  %122 = vmatprep.subr.bf16.mxu0 0
  %123 = vmatpush1.bf16.msra.mxu0 0
  %124 = vmatprep.subr.bf16.mxu0 0
  %125 = vmatpush1.bf16.msra.mxu0 0
  %126 = vmatprep.subr.bf16.mxu0 0
  %127 = vmatpush1.bf16.msra.mxu0 0
  %128 = vmatprep.subr.bf16.mxu0 0
  %129 = vmatpush1.bf16.msra.mxu0 0
  %130 = vmatprep.subr.bf16.mxu0 0
  %131 = vmatpush1.bf16.msra.mxu0 0
  %132 = vmatprep.subr.bf16.mxu0 0
  %133 = vmatpush1.bf16.msra.mxu0 0
  %134 = vmatprep.subr.bf16.mxu0 0
  %135 = vmatpush1.bf16.msra.mxu0 0
  %136 = vmatprep.subr.bf16.mxu0 0
  %137 = vmatpush1.bf16.msra.mxu0 0
  %138 = vmatprep.subr.bf16.mxu0 0
  %139 = vmatpush1.bf16.msra.mxu0 0
  %140 = vmatprep.subr.bf16.mxu0 0
  %141 = vmatpush1.bf16.msra.mxu0 0
  %142 = vmatprep.subr.bf16.mxu0 0
  %143 = vmatpush1.bf16.msra.mxu0 0
  %144 = vmatprep.subr.bf16.mxu0 0
  %145 = vmatpush1.bf16.msra.mxu0 0
  %146 = vmatprep.subr.bf16.mxu0 0
  %147 = vmatpush1.bf16.msra.mxu0 0
  %148 = vmatprep.subr.bf16.mxu0 0
  %149 = vmatpush1.bf16.msra.mxu0 0
  %150 = vmatprep.mubr.bf16.mxu0 0
  %151 = vmatmul.mubr.bf16.gmra.mrb[0].mxu0 %v62
  %v152 = vpop.f32.mrb[0].mxu0
  %v153 = vadd.f32 %v58, %v152
  %v154 = vpop.f32.mrb[0].mxu0
  %v155 = vadd.f32 %v58, %v154
  %v156 = vpop.f32.mrb[0].mxu0
  %v157 = vpop.f32.mrb[0].mxu0
  %158 = vdwg.mxu0
  %v159 = vmax.f32 %v112, 0.0
  %v160 = vmax.f32 %v114, 0.0
  %v161 = vmax.f32 %v153, 0.0
  %v162 = vmax.f32 %v155, 0.0
  %163 = vset.pattern.permute.xlu0 1
  %164 = vperm.xlu0 %163, %v40
  %v165 = vpop.permute.xlu0 %164
  %v167 = vmul.f32 %v159, %v165
  %v168 = vmul.f32 %v160, %v165
  %v169 = vmul.f32 %v161, %v165
  %v170 = vmul.f32 %v162, %v165
  %vm171 = vcmask 1043456
  %v172 = vsel %vm171, %v167, 0.0
  %v173 = vrot.slane %v172, 4
  %v174 = vadd.f32 %v172, %v173
  %v175 = vrot.slane %v174, 2
  %v176 = vadd.f32 %v174, %v175
  %v177 = vrot.slane %v176, 1
  %v178 = vadd.f32 %v176, %v177
  %v179 = vsel %vm171, %v168, 0.0
  %v180 = vrot.slane %v179, 4
  %v181 = vadd.f32 %v179, %v180
  %v182 = vrot.slane %v181, 2
  %v183 = vadd.f32 %v181, %v182
  %v184 = vrot.slane %v183, 1
  %v185 = vadd.f32 %v183, %v184
  %v186 = vsel %vm171, %v169, 0.0
  %v187 = vrot.slane %v186, 4
  %v188 = vadd.f32 %v186, %v187
  %v189 = vrot.slane %v188, 2
  %v190 = vadd.f32 %v188, %v189
  %v191 = vrot.slane %v190, 1
  %v192 = vadd.f32 %v190, %v191
  %v193 = vsel %vm171, %v170, 0.0
  %v194 = vrot.slane %v193, 4
  %v195 = vadd.f32 %v193, %v194
  %v196 = vrot.slane %v195, 2
  %v197 = vadd.f32 %v195, %v196
  %v198 = vrot.slane %v197, 1
  %v199 = vadd.f32 %v197, %v198
  %201 = vset.pattern.permute.xlu0 2
  %202 = vperm.xlu0 %201, %v41
  %v203 = vpop.permute.xlu0 %202
  %v205 = vadd.f32 %v178, %v203
  %v206 = vadd.f32 %v185, %v203
  %v207 = vadd.f32 %v192, %v203
  %v208 = vadd.f32 %v199, %v203
  %v209 = vsub.f32 0.0, %v205
  %v210 = vsub.f32 0.0, %v206
  %v211 = vsub.f32 0.0, %v207
  %v212 = vsub.f32 0.0, %v208
  %v213 = vmul.f32 %v209, 1.442695
  %v214 = vpow.pop %v213
  %v215 = vmul.f32 %v210, 1.442695
  %v216 = vpow.pop %v215
  %v217 = vmul.f32 %v211, 1.442695
  %v218 = vpow.pop %v217
  %v219 = vmul.f32 %v212, 1.442695
  %v220 = vpow.pop %v219
  %v221 = vadd.f32 %v214, 1.0
  %v222 = vadd.f32 %v216, 1.0
  %v223 = vadd.f32 %v218, 1.0
  %v224 = vadd.f32 %v220, 1.0
  %v225 = vrcp.pop %v221
  %v226 = vrcp.pop %v222
  %v227 = vrcp.pop %v223
  %v228 = vrcp.pop %v224
  %v229 = vld [vmem:[%s1] sm:$0xff]
  %v230 = vlaneseq
  %v231 = vshrl.u32 %v230, 7
  %v232 = vsub.s32 0, %v231
  %v233 = vrot.slane %v225, %v232
  %v234 = vlaneseq
  %v235 = vshrl.u32 %v234, 7
  %v236 = vsub.s32 0, %v235
  %v237 = vrot.slane %v226, %v236
  %v240 = vcombine.low %v233, %v237
  %v242 = vmul.f32 %v229, %v240
  %243 = vst [vmem:[%s4] sm:$0xff] %v242
  %v244 = vld [vmem:[%s33] sm:$0xff]
  %v245 = vlaneseq
  %v246 = vshrl.u32 %v245, 7
  %v247 = vsub.s32 0, %v246
  %v248 = vrot.slane %v227, %v247
  %v249 = vlaneseq
  %v250 = vshrl.u32 %v249, 7
  %v251 = vsub.s32 0, %v250
  %v252 = vrot.slane %v228, %v251
  %v255 = vcombine.low %v248, %v252
  %v257 = vmul.f32 %v244, %v255
  %s258 = scalar_lea.vmem %s4, 8
  %259 = vst [vmem:[%s258] sm:$0xff] %v257
  // Predicated region
  $region18: #{attention_gate_forward.1} parent=0 // pred_check
    _
  $region19: #{attention_gate_forward.1} parent=0 // pred_check_branch
    %261 = sbr.rel (0) target = $region21
  $region20: #{attention_gate_forward.1} parent=0 // pred_region
    _
  $region21: #{attention_gate_forward.1} parent=0 // pred_fallthru
    _
  // Predicated region
  $region22: #{attention_gate_forward.1} parent=0 // pred_check
    _
  $region23: #{attention_gate_forward.1} parent=0 // pred_check_branch
    %263 = sbr.rel (0) target = $region25
  $region24: #{attention_gate_forward.1} parent=0 // pred_region
    _
  $region25: #{attention_gate_forward.1} parent=0 // pred_fallthru
    _

</llo_original>
